<compile_context>
chip_gen: v7x
topology: tpu7x:2x2x1
jax: 0.10.0
libtpu: 0.0.40
codegen_flags: <defaults>
</compile_context>

<pallas_src>
import functools

import jax
import jax.numpy as jnp
from jax import lax
from jax.experimental import pallas as pl
from jax.experimental.pallas import tpu as pltpu


def _round_up(x, m):
    return ((x + m - 1) // m) * m


def _cdiv(a, b):
    return -(-a // b)


def _tpu_info():
    """(vmem_capacity_bytes, num_tensorcores) with safe fallbacks."""
    vmem_cap = 128 * 1024 * 1024
    cores = 1
    try:
        info = pltpu.get_tpu_info()
        v = getattr(info, "vmem_capacity_bytes", None)
        if v:
            vmem_cap = int(v)
        c = None
        for attr in ("num_cores", "num_tensorcores", "tensorcores_per_chip", "cores_per_chip"):
            c = getattr(info, attr, None)
            if c:
                break
        if c:
            cores = int(c)
        elif vmem_cap <= 64 * 1024 * 1024:
            cores = 2  # v7x heuristic: 64 MiB VMEM per TensorCore, 2 TCs per chip
    except Exception:
        pass
    return vmem_cap, cores


def _contrastive_kernel(xc_ref, wt_ref, bconv_ref, w1_ref, b1_ref, w2_ref, b2_ref,
                        out_ref, *, block_b, hw, rt):
    """One batch chunk per grid program.

    xc_ref   : [R_pad, KP]  bf16  im2col'd rows (per image: H*W rows of 9*C patch values)
    wt_ref   : [KP, DP]     bf16  conv weight, row = (ky*3+kx)*C + c
    bconv_ref: [1, DP]      f32
    w1_ref   : [DP, DP]     f32
    b1_ref   : [1, DP]      f32
    w2_ref   : [DP, FP]     f32
    b2_ref   : [1, FP]      f32
    out_ref  : [block_b,FP] f32
    """
    n_tiles = hw // rt
    dp = wt_ref.shape[1]
    w_conv = wt_ref[...]        # resident, tiny (hoisted out of the loops)
    b_conv = bconv_ref[...]

    def tile_sum(row0):
        xs = xc_ref[pl.ds(row0, rt), :]                                   # [rt, KP] bf16
        c = jnp.dot(xs, w_conv, preferred_element_type=jnp.float32)       # one K=9C MXU matmul
        c = jnp.maximum(c + b_conv, 0.0)                                   # [rt, DP] f32
        return jnp.sum(c, axis=0, keepdims=True)                           # [1, DP]

    def pool_image(b):
        base = b * hw
        if n_tiles <= 4:                                  # short trip count: fully static
            total = tile_sum(base)
            for t in range(1, n_tiles):
                total = total + tile_sum(base + t * rt)
            return total

        def body(t, acc):                                 # long trip count: fori_loop
            row0 = base + t * rt
            if (hw % 8 == 0) and (rt % 8 == 0):
                row0 = pl.multiple_of(row0, 8)
            return acc + tile_sum(row0)
        return lax.fori_loop(0, n_tiles, body, jnp.zeros((1, dp), jnp.float32))

    # Per-image masked mean pool (only valid output positions are ever summed).
    pooled = jnp.concatenate([pool_image(b) for b in range(block_b)], axis=0)
    pooled = pooled * (1.0 / hw)                                           # [block_b, DP]

    # MLP contrastive head (f32; tiny matmuls).
    h = jnp.maximum(jnp.dot(pooled, w1_ref[...], preferred_element_type=jnp.float32)
                    + b1_ref[...], 0.0)
    f = jnp.dot(h, w2_ref[...], preferred_element_type=jnp.float32) + b2_ref[...]

    # F.normalize(dim=1): x / max(||x||, eps)  ==  x * rsqrt(max(||x||^2, eps^2))  (EUP rsqrt)
    ss = jnp.sum(f * f, axis=1, keepdims=True)
    out_ref[...] = (f * lax.rsqrt(jnp.maximum(ss, 1e-24))).astype(out_ref.dtype)


@jax.jit
def contrastive_forward(x, conv_w, conv_b, w1, b1, w2, b2):
    """x: [B, C, H, W] NCHW (f32).  conv_w: [D, C, 3, 3] OIHW.  Linears given as [out, in]."""
    B, C, H, W = x.shape
    D = conv_w.shape[0]
    F = w2.shape[0]
    DP = _round_up(D, 128)
    FP = _round_up(F, 128)
    HW = H * W
    K = 9 * C
    KP = _round_up(K, 8)

    MiB = 1024 * 1024
    vmem_cap, num_cores = _tpu_info()

    # Row tile inside the kernel (always divides HW).
    if HW <= 512:
        RT = HW
    elif HW % 256 == 0:
        RT = 256
    elif HW % 128 == 0:
        RT = 128
    else:
        RT = HW

    # Batch-chunk sizing from a per-generation VMEM budget (double-buffered slab + residents).
    budget = min(vmem_cap // 2, 48 * MiB)
    per_image_stream = HW * max(KP, 128) * 2            # lane-padded bf16 VMEM tile per image
    residents = (KP * DP * 2 + DP * DP * 4 + DP * FP * 4 + (2 * DP + FP) * 4
                 + 3 * RT * DP * 4 + 512 * 1024)
    block_b = max(1, min(B, (budget - residents) // max(2 * per_image_stream, 1), 8))
    if num_cores >= 2 and B > 1:
        block_b = min(block_b, _cdiv(B, num_cores))     # >=2 chunks only when 2 TCs exist
    block_b = max(1, block_b)
    num_chunks = _cdiv(B, block_b)
    Bpad = num_chunks * block_b
    R = block_b * HW
    R_pad = _round_up(R, 8)

    # ---- im2col in the wrapper: conv becomes one K=9*C matmul per row tile in the kernel.
    x_nhwc = jnp.transpose(x.astype(jnp.float32), (0, 2, 3, 1))            # [B, H, W, C]
    x_sp = jnp.pad(x_nhwc, ((0, 0), (1, 1), (1, 1), (0, 0)))               # [B, H+2, W+2, C]
    patches = [x_sp[:, dy:dy + H, dx:dx + W, :] for dy in range(3) for dx in range(3)]
    xcol = jnp.concatenate(patches, axis=-1).reshape(B, HW, K)             # [B, HW, 9C]
    xcol = jnp.pad(xcol, ((0, Bpad - B), (0, 0), (0, KP - K)))
    xcol = xcol.reshape(num_chunks, R, KP)
    if R_pad != R:
        xcol = jnp.pad(xcol, ((0, 0), (0, R_pad - R), (0, 0)))
    xcol = xcol.astype(jnp.bfloat16)                                       # [chunks, R_pad, KP]

    # ---- conv weights: row = (ky*3+kx)*C + c, col = d; padded; bf16 (f32 accumulation).
    wt = jnp.transpose(conv_w.astype(jnp.float32), (2, 3, 1, 0)).reshape(K, D)
    wt = jnp.pad(wt, ((0, KP - K), (0, DP - D))).astype(jnp.bfloat16)
    bconv = jnp.pad(conv_b.astype(jnp.float32), (0, DP - D)).reshape(1, DP)

    # ---- head weights as [in, out], zero-padded to lane-friendly sizes (f32).
    w1p = jnp.pad(w1.T.astype(jnp.float32), ((0, DP - D), (0, DP - D)))
    b1p = jnp.pad(b1.astype(jnp.float32), (0, DP - D)).reshape(1, DP)
    w2p = jnp.pad(w2.T.astype(jnp.float32), ((0, DP - D), (0, FP - F)))
    b2p = jnp.pad(b2.astype(jnp.float32), (0, FP - F)).reshape(1, FP)

    kernel = functools.partial(_contrastive_kernel, block_b=block_b, hw=HW, rt=RT)

    grid_spec = pltpu.PrefetchScalarGridSpec(
        num_scalar_prefetch=0,
        grid=(num_chunks,),
        in_specs=[
            pl.BlockSpec((None, R_pad, KP), lambda i: (i, 0, 0)),   # only pipelined stream
            pl.BlockSpec((KP, DP), lambda i: (0, 0)),               # residents: constant maps
            pl.BlockSpec((1, DP), lambda i: (0, 0)),
            pl.BlockSpec((DP, DP), lambda i: (0, 0)),
            pl.BlockSpec((1, DP), lambda i: (0, 0)),
            pl.BlockSpec((DP, FP), lambda i: (0, 0)),
            pl.BlockSpec((1, FP), lambda i: (0, 0)),
        ],
        out_specs=pl.BlockSpec((None, block_b, FP), lambda i: (i, 0, 0)),
    )

    est_usage = 2 * block_b * per_image_stream + residents
    vmem_limit = int(min(max(32 * MiB, 2 * est_usage), max(vmem_cap - 8 * MiB, 32 * MiB)))

    # Advisory cost estimate on true (unpadded) dims.
    flops = int(2 * B * HW * K * D + B * HW * D + 2 * B * (D * D + D * F))
    bytes_accessed = int(xcol.size * 2 + wt.size * 2
                         + (bconv.size + w1p.size + b1p.size + w2p.size + b2p.size) * 4
                         + Bpad * FP * 4)
    cost = pl.CostEstimate(flops=flops, transcendentals=int(B),
                           bytes_accessed=bytes_accessed)

    out = pl.pallas_call(
        kernel,
        out_shape=jax.ShapeDtypeStruct((num_chunks, block_b, FP), jnp.float32),
        grid_spec=grid_spec,
        compiler_params=pltpu.CompilerParams(
            dimension_semantics=("parallel",),
            vmem_limit_bytes=vmem_limit),
        cost_estimate=cost,
    )(xcol, wt, bconv, w1p, b1p, w2p, b2p)

    return out.reshape(Bpad, FP)[:B, :F]


def reference_forward(x, conv_w, conv_b, w1, b1, w2, b2):
    """Pure-JAX reference mirroring the PyTorch forward (f32, highest matmul precision)."""
    hi = lax.Precision.HIGHEST
    conv = lax.conv_general_dilated(
        x.astype(jnp.float32), conv_w.astype(jnp.float32),
        window_strides=(1, 1), padding="SAME",
        dimension_numbers=("NCHW", "OIHW", "NCHW"), precision=hi)
    conv = jnp.maximum(conv + conv_b[None, :, None, None], 0.0)
    pooled = jnp.mean(conv, axis=(2, 3))                                   # [B, D]
    h = jnp.maximum(jnp.dot(pooled, w1.T, precision=hi) + b1, 0.0)
    f = jnp.dot(h, w2.T, precision=hi) + b2
    return f / jnp.maximum(jnp.sqrt(jnp.sum(f * f, axis=1, keepdims=True)), 1e-12)


if __name__ == "__main__":
    # Small shapes consistent with the module: batch=2, channels=4, spatial=16,
    # backbone_dim=32, features_dim=128.
    B, C, H, W = 2, 4, 16, 16
    backbone_dim, features_dim = 32, 128

    key = jax.random.PRNGKey(0)
    kx_, kcw, kcb, kw1, kb1, kw2, kb2 = jax.random.split(key, 7)

    x = jax.random.normal(kx_, (B, C, H, W), dtype=jnp.float32)

    scale_c = 1.0 / (C * 9) ** 0.5
    scale_d = 1.0 / backbone_dim ** 0.5
    conv_w = jax.random.uniform(kcw, (backbone_dim, C, 3, 3), jnp.float32, -1.0, 1.0) * scale_c
    conv_b = jax.random.uniform(kcb, (backbone_dim,), jnp.float32, -1.0, 1.0) * scale_c
    w1 = jax.random.uniform(kw1, (backbone_dim, backbone_dim), jnp.float32, -1.0, 1.0) * scale_d
    b1 = jax.random.uniform(kb1, (backbone_dim,), jnp.float32, -1.0, 1.0) * scale_d
    w2 = jax.random.uniform(kw2, (features_dim, backbone_dim), jnp.float32, -1.0, 1.0) * scale_d
    b2 = jax.random.uniform(kb2, (features_dim,), jnp.float32, -1.0, 1.0) * scale_d

    out = jax.block_until_ready(contrastive_forward(x, conv_w, conv_b, w1, b1, w2, b2))
    assert out.shape == (B, features_dim)

    # Tight check: reference fed the same bf16-rounded conv inputs the kernel feeds the MXU.
    x_q = x.astype(jnp.bfloat16).astype(jnp.float32)
    cw_q = conv_w.astype(jnp.bfloat16).astype(jnp.float32)
    ref_q = reference_forward(x_q, cw_q, conv_b, w1, b1, w2, b2)
    assert jnp.allclose(out, ref_q, atol=2e-3, rtol=2e-3), "mismatch vs bf16-quantized reference"

    # Loose check vs the pure-f32 reference (only difference: bf16 rounding of the conv inputs).
    ref = reference_forward(x, conv_w, conv_b, w1, b1, w2, b2)
    assert jnp.allclose(out, ref, atol=2e-2, rtol=2e-2), "mismatch vs f32 reference"

    print("KERNEL_OK")
</pallas_src>

<mosaic_0001>
module attributes {stable_mosaic.version = 11 : i64} {
  func.func @_contrastive_kernel(%arg0: i32, %arg1: memref<1x512x40xbf16, #tpu.memory_space<vmem>>, %arg2: memref<40x128xbf16, #tpu.memory_space<vmem>>, %arg3: memref<1x128xf32, #tpu.memory_space<vmem>>, %arg4: memref<128x128xf32, #tpu.memory_space<vmem>>, %arg5: memref<1x128xf32, #tpu.memory_space<vmem>>, %arg6: memref<128x128xf32, #tpu.memory_space<vmem>>, %arg7: memref<1x128xf32, #tpu.memory_space<vmem>>, %arg8: memref<1x2x128xf32, #tpu.memory_space<vmem>>) attributes {dimension_semantics = [#tpu.dimension_semantics<parallel>], iteration_bounds = array<i64: 1>, scalar_prefetch = 0 : i64, scratch_operands = 0 : i64, tpu.core_type = #tpu.core_type<tc>, window_params = [{transform_indices = @transform_0, window_bounds = array<i64: 1, 512, 40>}, {pipeline_mode = #tpu.pipeline_mode<synchronous>, transform_indices = @transform_1, window_bounds = array<i64: 40, 128>}, {pipeline_mode = #tpu.pipeline_mode<synchronous>, transform_indices = @transform_2, window_bounds = array<i64: 1, 128>}, {pipeline_mode = #tpu.pipeline_mode<synchronous>, transform_indices = @transform_3, window_bounds = array<i64: 128, 128>}, {pipeline_mode = #tpu.pipeline_mode<synchronous>, transform_indices = @transform_4, window_bounds = array<i64: 1, 128>}, {pipeline_mode = #tpu.pipeline_mode<synchronous>, transform_indices = @transform_5, window_bounds = array<i64: 128, 128>}, {pipeline_mode = #tpu.pipeline_mode<synchronous>, transform_indices = @transform_6, window_bounds = array<i64: 1, 128>}, {transform_indices = @transform_7, window_bounds = array<i64: 1, 2, 128>}]} {
    %c0 = arith.constant 0 : index
    %c0_0 = arith.constant 0 : index
    %0 = vector.load %arg2[%c0, %c0_0] : memref<40x128xbf16, #tpu.memory_space<vmem>>, vector<40x128xbf16>
    %c0_1 = arith.constant 0 : index
    %c0_2 = arith.constant 0 : index
    %1 = vector.load %arg3[%c0_1, %c0_2] : memref<1x128xf32, #tpu.memory_space<vmem>>, vector<1x128xf32>
    %c0_3 = arith.constant 0 : index
    %c0_4 = arith.constant 0 : index
    %c0_5 = arith.constant 0 : index
    %2 = vector.load %arg1[%c0_3, %c0_4, %c0_5] : memref<1x512x40xbf16, #tpu.memory_space<vmem>>, vector<1x256x40xbf16>
    %3 = vector.shape_cast %2 : vector<1x256x40xbf16> to vector<256x40xbf16>
    %cst = arith.constant dense<0.000000e+00> : vector<256x128xf32>
    %4 = tpu.matmul %3, %0, %cst {dimension_numbers = #tpu.dot_dimension_numbers<[1], [0], [0], [1], [0, 0, 1, 1], [], []>} : vector<256x40xbf16>, vector<40x128xbf16>, vector<256x128xf32> -> vector<256x128xf32>
    %5 = vector.broadcast %1 : vector<1x128xf32> to vector<256x128xf32>
    %6 = arith.addf %4, %5 : vector<256x128xf32>
    %cst_6 = arith.constant 0.000000e+00 : f32
    %7 = vector.broadcast %cst_6 : f32 to vector<256x128xf32>
    %8 = arith.maximumf %6, %7 : vector<256x128xf32>
    %cst_7 = arith.constant dense<0.000000e+00> : vector<128xf32>
    %9 = vector.multi_reduction <add>, %8, %cst_7 [0] : vector<256x128xf32> to vector<128xf32>
    %10 = vector.shape_cast %9 : vector<128xf32> to vector<1x128xf32>
    %c0_8 = arith.constant 0 : index
    %c256 = arith.constant 256 : index
    %c0_9 = arith.constant 0 : index
    %11 = vector.load %arg1[%c0_8, %c256, %c0_9] : memref<1x512x40xbf16, #tpu.memory_space<vmem>>, vector<1x256x40xbf16>
    %12 = vector.shape_cast %11 : vector<1x256x40xbf16> to vector<256x40xbf16>
    %cst_10 = arith.constant dense<0.000000e+00> : vector<256x128xf32>
    %13 = tpu.matmul %12, %0, %cst_10 {dimension_numbers = #tpu.dot_dimension_numbers<[1], [0], [0], [1], [0, 0, 1, 1], [], []>} : vector<256x40xbf16>, vector<40x128xbf16>, vector<256x128xf32> -> vector<256x128xf32>
    %14 = vector.broadcast %1 : vector<1x128xf32> to vector<256x128xf32>
    %15 = arith.addf %13, %14 : vector<256x128xf32>
    %cst_11 = arith.constant 0.000000e+00 : f32
    %16 = vector.broadcast %cst_11 : f32 to vector<256x128xf32>
    %17 = arith.maximumf %15, %16 : vector<256x128xf32>
    %cst_12 = arith.constant dense<0.000000e+00> : vector<128xf32>
    %18 = vector.multi_reduction <add>, %17, %cst_12 [0] : vector<256x128xf32> to vector<128xf32>
    %19 = vector.shape_cast %18 : vector<128xf32> to vector<1x128xf32>
    %20 = tpu.concatenate %10, %19 in 0 : vector<1x128xf32>, vector<1x128xf32> -> vector<2x128xf32>
    %cst_13 = arith.constant 3.906250e-03 : f32
    %21 = vector.broadcast %cst_13 : f32 to vector<2x128xf32>
    %22 = arith.mulf %20, %21 : vector<2x128xf32>
    %c0_14 = arith.constant 0 : index
    %c0_15 = arith.constant 0 : index
    %23 = vector.load %arg4[%c0_14, %c0_15] : memref<128x128xf32, #tpu.memory_space<vmem>>, vector<128x128xf32>
    %cst_16 = arith.constant dense<0.000000e+00> : vector<2x128xf32>
    %24 = tpu.matmul %22, %23, %cst_16 {dimension_numbers = #tpu.dot_dimension_numbers<[1], [0], [0], [1], [0, 0, 1, 1], [], []>} : vector<2x128xf32>, vector<128x128xf32>, vector<2x128xf32> -> vector<2x128xf32>
    %c0_17 = arith.constant 0 : index
    %c0_18 = arith.constant 0 : index
    %25 = vector.load %arg5[%c0_17, %c0_18] : memref<1x128xf32, #tpu.memory_space<vmem>>, vector<1x128xf32>
    %26 = vector.broadcast %25 : vector<1x128xf32> to vector<2x128xf32>
    %27 = arith.addf %24, %26 : vector<2x128xf32>
    %cst_19 = arith.constant 0.000000e+00 : f32
    %28 = vector.broadcast %cst_19 : f32 to vector<2x128xf32>
    %29 = arith.maximumf %27, %28 : vector<2x128xf32>
    %c0_20 = arith.constant 0 : index
    %c0_21 = arith.constant 0 : index
    %30 = vector.load %arg6[%c0_20, %c0_21] : memref<128x128xf32, #tpu.memory_space<vmem>>, vector<128x128xf32>
    %cst_22 = arith.constant dense<0.000000e+00> : vector<2x128xf32>
    %31 = tpu.matmul %29, %30, %cst_22 {dimension_numbers = #tpu.dot_dimension_numbers<[1], [0], [0], [1], [0, 0, 1, 1], [], []>} : vector<2x128xf32>, vector<128x128xf32>, vector<2x128xf32> -> vector<2x128xf32>
    %c0_23 = arith.constant 0 : index
    %c0_24 = arith.constant 0 : index
    %32 = vector.load %arg7[%c0_23, %c0_24] : memref<1x128xf32, #tpu.memory_space<vmem>>, vector<1x128xf32>
    %33 = vector.broadcast %32 : vector<1x128xf32> to vector<2x128xf32>
    %34 = arith.addf %31, %33 : vector<2x128xf32>
    %35 = arith.mulf %34, %34 : vector<2x128xf32>
    %cst_25 = arith.constant dense<0.000000e+00> : vector<2xf32>
    %36 = vector.multi_reduction <add>, %35, %cst_25 [1] : vector<2x128xf32> to vector<2xf32>
    %37 = vector.shape_cast %36 : vector<2xf32> to vector<2x1xf32>
    %cst_26 = arith.constant 1.000000e-24 : f32
    %38 = vector.broadcast %cst_26 : f32 to vector<2x1xf32>
    %39 = arith.maximumf %37, %38 : vector<2x1xf32>
    %40 = math.rsqrt %39 : vector<2x1xf32>
    %41 = vector.broadcast %40 : vector<2x1xf32> to vector<2x128xf32>
    %42 = arith.mulf %34, %41 : vector<2x128xf32>
    %c0_27 = arith.constant 0 : index
    %c0_28 = arith.constant 0 : index
    %c0_29 = arith.constant 0 : index
    %43 = vector.load %arg8[%c0_27, %c0_28, %c0_29] : memref<1x2x128xf32, #tpu.memory_space<vmem>>, vector<1x2x128xf32>
    %44 = vector.shape_cast %43 : vector<1x2x128xf32> to vector<2x128xf32>
    %45 = vector.shape_cast %42 : vector<2x128xf32> to vector<1x2x128xf32>
    tpu.vector_store %arg8[%c0_27, %c0_28, %c0_29], %45 {strides = array<i32>} : memref<1x2x128xf32, #tpu.memory_space<vmem>>, vector<1x2x128xf32>,
    return
  }
  func.func @transform_0(%arg0: i32) -> (i32, i32, i32) {
    %c0_i32 = arith.constant 0 : i32
    %c0_i32_0 = arith.constant 0 : i32
    %c0_i32_1 = arith.constant 0 : i32
    return %arg0, %c0_i32, %c0_i32_0 : i32, i32, i32
  }
  func.func @transform_1(%arg0: i32) -> (i32, i32) {
    %c0_i32 = arith.constant 0 : i32
    %c0_i32_0 = arith.constant 0 : i32
    %c0_i32_1 = arith.constant 0 : i32
    return %c0_i32, %c0_i32_0 : i32, i32
  }
  func.func @transform_2(%arg0: i32) -> (i32, i32) {
    %c0_i32 = arith.constant 0 : i32
    %c0_i32_0 = arith.constant 0 : i32
    %c0_i32_1 = arith.constant 0 : i32
    return %c0_i32, %c0_i32_0 : i32, i32
  }
  func.func @transform_3(%arg0: i32) -> (i32, i32) {
    %c0_i32 = arith.constant 0 : i32
    %c0_i32_0 = arith.constant 0 : i32
    %c0_i32_1 = arith.constant 0 : i32
    return %c0_i32, %c0_i32_0 : i32, i32
  }
  func.func @transform_4(%arg0: i32) -> (i32, i32) {
    %c0_i32 = arith.constant 0 : i32
    %c0_i32_0 = arith.constant 0 : i32
    %c0_i32_1 = arith.constant 0 : i32
    return %c0_i32, %c0_i32_0 : i32, i32
  }
  func.func @transform_5(%arg0: i32) -> (i32, i32) {
    %c0_i32 = arith.constant 0 : i32
    %c0_i32_0 = arith.constant 0 : i32
    %c0_i32_1 = arith.constant 0 : i32
    return %c0_i32, %c0_i32_0 : i32, i32
  }
  func.func @transform_6(%arg0: i32) -> (i32, i32) {
    %c0_i32 = arith.constant 0 : i32
    %c0_i32_0 = arith.constant 0 : i32
    %c0_i32_1 = arith.constant 0 : i32
    return %c0_i32, %c0_i32_0 : i32, i32
  }
  func.func @transform_7(%arg0: i32) -> (i32, i32, i32) {
    %c0_i32 = arith.constant 0 : i32
    %c0_i32_0 = arith.constant 0 : i32
    %c0_i32_1 = arith.constant 0 : i32
    return %arg0, %c0_i32, %c0_i32_0 : i32, i32, i32
  }
}

</mosaic_0001>

<llo_original>
// kernel: contrastive_forward.1
$region0: #{contrastive_forward.1}
  #allocation0 [shape = 'u32[]', space=smem, size = 0x4, offset = 0x4, fixed_abs, tag = 'smem constant byte address 0x4 - core index']
  #allocation1 [shape = 'u32[144,128]{1,0:T(1,128)}', space=vmem, size = 0x12000, scoped, tag = 'internal scratch']
  %s0 = inlined_call_operand.vmem [shape: bf16[1,512,40], index: 0, kind: input, shape index: {}]
  %s1 = inlined_call_operand.vmem [shape: bf16[40,128], index: 1, kind: input, shape index: {}]
  %s2 = inlined_call_operand.vmem [shape: f32[1,128], index: 2, kind: input, shape index: {}]
  %s3 = inlined_call_operand.vmem [shape: f32[128,128], index: 3, kind: input, shape index: {}]
  %s4 = inlined_call_operand.vmem [shape: f32[1,128], index: 4, kind: input, shape index: {}]
  %s5 = inlined_call_operand.vmem [shape: f32[128,128], index: 5, kind: input, shape index: {}]
  %s6 = inlined_call_operand.vmem [shape: f32[1,128], index: 6, kind: input, shape index: {}]
  %s7 = inlined_call_operand.hbm [shape: f32[1,2,128], index: 7, kind: output, shape index: {}]
  %s8 = sld [smem:[#allocation0]]
  $region38: #{contrastive_forward.1} parent=0
    _
  %s10 = ssub.s32 1, %s8
  %s11 = scalar_select 0, %s10, %s8
  $region1: #{contrastive_forward.1} parent=0
    #allocation2 [shape = 'u8[1024]{0}', space=vmem, size = 0x400, scoped, tag = 'output window, operand 0, single buffered']
    #allocation3 [shape = 's32[1]{0}', space=sflag, size = 0x4, scoped, tag = 'scoped memory for contrastive_forward.1']
    %12 = vsyncpa [#allocation3], 0
    // Predicated region
    $region2: #{contrastive_forward.1} parent=1 // pred_check
      _
    $region3: #{contrastive_forward.1} parent=1 // pred_check_branch
      %14 = sbr.rel (0) target = $region5
    $region4: #{contrastive_forward.1} parent=1 // pred_region
      _
    $region5: #{contrastive_forward.1} parent=1 // pred_fallthru
      _
    // Predicated region
    $region6: #{contrastive_forward.1} parent=1 // pred_check
      _
    $region7: #{contrastive_forward.1} parent=1 // pred_check_branch
      %16 = sbr.rel (0) target = $region9
    $region8: #{contrastive_forward.1} parent=1 // pred_region
      _
    $region9: #{contrastive_forward.1} parent=1 // pred_fallthru
      _
    // Predicated region
    $region10: #{contrastive_forward.1} parent=1 // pred_check
      _
    $region11: #{contrastive_forward.1} parent=1 // pred_check_branch
      %18 = sbr.rel (0) target = $region13
    $region12: #{contrastive_forward.1} parent=1 // pred_region
      _
    $region13: #{contrastive_forward.1} parent=1 // pred_fallthru
      _
    // Predicated region
    $region14: #{contrastive_forward.1} parent=1 // pred_check
      _
    $region15: #{contrastive_forward.1} parent=1 // pred_check_branch
      %20 = sbr.rel (0) target = $region17
    $region16: #{contrastive_forward.1} parent=1 // pred_region
      _
    $region17: #{contrastive_forward.1} parent=1 // pred_fallthru
      _
    // Predicated region
    $region18: #{contrastive_forward.1} parent=1 // pred_check
      _
    $region19: #{contrastive_forward.1} parent=1 // pred_check_branch
      %22 = sbr.rel (0) target = $region21
    $region20: #{contrastive_forward.1} parent=1 // pred_region
      _
    $region21: #{contrastive_forward.1} parent=1 // pred_fallthru
      _
    // Predicated region
    $region22: #{contrastive_forward.1} parent=1 // pred_check
      _
    $region23: #{contrastive_forward.1} parent=1 // pred_check_branch
      %24 = sbr.rel (0) target = $region25
    $region24: #{contrastive_forward.1} parent=1 // pred_region
      _
    $region25: #{contrastive_forward.1} parent=1 // pred_fallthru
      _
    // Predicated region
    $region26: #{contrastive_forward.1} parent=1 // pred_check
      _
    $region27: #{contrastive_forward.1} parent=1 // pred_check_branch
      %26 = sbr.rel (0) target = $region29
    $region28: #{contrastive_forward.1} parent=1 // pred_region
      _
    $region29: #{contrastive_forward.1} parent=1 // pred_fallthru
      _
    %v28 = vld [vmem:[%s1] sm:$0xf]
    %v29 = vld [vmem:[%s1 + $0x4] sm:$0xf]
    %v30 = vld [vmem:[%s1 + $0x8] sm:$0xf]
    %v31 = vld [vmem:[%s1 + $0xc] sm:$0xf]
    %v32 = vld [vmem:[%s1 + $0x10] sm:$0xf]
    %v33 = vld [vmem:[%s2] sm:$0x1]
    %v34 = vld [vmem:[%s0] sm:$0xf]
    %v35 = vld [vmem:[%s0 + $0x4] sm:$0xf]
    %v36 = vld [vmem:[%s0 + $0x8] sm:$0xf]
    %v37 = vld [vmem:[%s0 + $0xc] sm:$0xf]
    %v38 = vld [vmem:[%s0 + $0x10] sm:$0xf]
    %v39 = vld [vmem:[%s0 + $0x14] sm:$0xf]
    %v40 = vld [vmem:[%s0 + $0x18] sm:$0xf]
    %v41 = vld [vmem:[%s0 + $0x1c] sm:$0xf]
    %v42 = vld [vmem:[%s0 + $0x20] sm:$0xf]
    %v43 = vld [vmem:[%s0 + $0x24] sm:$0xf]
    %v44 = vld [vmem:[%s0 + $0x28] sm:$0xf]
    %v45 = vld [vmem:[%s0 + $0x2c] sm:$0xf]
    %v46 = vld [vmem:[%s0 + $0x30] sm:$0xf]
    %v47 = vld [vmem:[%s0 + $0x34] sm:$0xf]
    %v48 = vld [vmem:[%s0 + $0x38] sm:$0xf]
    %v49 = vld [vmem:[%s0 + $0x3c] sm:$0xf]
    %v50 = vld [vmem:[%s0 + $0x40] sm:$0xf]
    %v51 = vld [vmem:[%s0 + $0x44] sm:$0xf]
    %v52 = vld [vmem:[%s0 + $0x48] sm:$0xf]
    %v53 = vld [vmem:[%s0 + $0x4c] sm:$0xf]
    %v54 = vld [vmem:[%s0 + $0x50] sm:$0xf]
    %v55 = vld [vmem:[%s0 + $0x54] sm:$0xf]
    %v56 = vld [vmem:[%s0 + $0x58] sm:$0xf]
    %v57 = vld [vmem:[%s0 + $0x5c] sm:$0xf]
    %v58 = vld [vmem:[%s0 + $0x60] sm:$0xf]
    %v59 = vld [vmem:[%s0 + $0x64] sm:$0xf]
    %v60 = vld [vmem:[%s0 + $0x68] sm:$0xf]
    %v61 = vld [vmem:[%s0 + $0x6c] sm:$0xf]
    %v62 = vld [vmem:[%s0 + $0x70] sm:$0xf]
    %v63 = vld [vmem:[%s0 + $0x74] sm:$0xf]
    %v64 = vld [vmem:[%s0 + $0x78] sm:$0xf]
    %v65 = vld [vmem:[%s0 + $0x7c] sm:$0xf]
    %v67 = vlaneseq
    %v68 = vshrl.u32 %v67, 7
    %v69 = vsub.s32 0, %v68
    %v70 = vrot.slane %v33, %v69
    %v104 = vunpack.c.l.b16 %v34
    %v105 = vunpack.c.l.b16 %v35
    %v106 = vunpack.c.l.b16 %v36
    %v107 = vunpack.c.l.b16 %v37
    %v108 = vunpack.c.l.b16 %v38
    %v109 = vunpack.c.l.b16 %v39
    %v110 = vunpack.c.l.b16 %v40
    %v111 = vunpack.c.l.b16 %v41
    %v112 = vunpack.c.l.b16 %v42
    %v113 = vunpack.c.l.b16 %v43
    %v114 = vunpack.c.l.b16 %v44
    %v115 = vunpack.c.l.b16 %v45
    %v116 = vunpack.c.l.b16 %v46
    %v117 = vunpack.c.l.b16 %v47
    %v118 = vunpack.c.l.b16 %v48
    %v119 = vunpack.c.l.b16 %v49
    %v120 = vunpack.c.l.b16 %v50
    %v121 = vunpack.c.l.b16 %v51
    %v122 = vunpack.c.l.b16 %v52
    %v123 = vunpack.c.l.b16 %v53
    %v124 = vunpack.c.l.b16 %v54
    %v125 = vunpack.c.l.b16 %v55
    %v126 = vunpack.c.l.b16 %v56
    %v127 = vunpack.c.l.b16 %v57
    %v128 = vunpack.c.l.b16 %v58
    %v129 = vunpack.c.l.b16 %v59
    %v130 = vunpack.c.l.b16 %v60
    %v131 = vunpack.c.l.b16 %v61
    %v132 = vunpack.c.l.b16 %v62
    %v133 = vunpack.c.l.b16 %v63
    %v134 = vunpack.c.l.b16 %v64
    %v135 = vunpack.c.l.b16 %v65
    %v136 = vpack.c.b16 %v105, %v104
    %v137 = vpack.c.b16 %v107, %v106
    %v138 = vpack.c.b16 %v109, %v108
    %v139 = vpack.c.b16 %v111, %v110
    %v140 = vpack.c.b16 %v113, %v112
    %v141 = vpack.c.b16 %v115, %v114
    %v142 = vpack.c.b16 %v117, %v116
    %v143 = vpack.c.b16 %v119, %v118
    %v144 = vpack.c.b16 %v121, %v120
    %v145 = vpack.c.b16 %v123, %v122
    %v146 = vpack.c.b16 %v125, %v124
    %v147 = vpack.c.b16 %v127, %v126
    %v148 = vpack.c.b16 %v129, %v128
    %v149 = vpack.c.b16 %v131, %v130
    %v150 = vpack.c.b16 %v133, %v132
    %v151 = vpack.c.b16 %v135, %v134
    %v157 = vunpack.c.l.b16 %v28
    %v158 = vunpack.c.l.b16 %v29
    %v159 = vunpack.c.l.b16 %v30
    %v160 = vunpack.c.l.b16 %v31
    %v161 = vunpack.c.l.b16 %v32
    %v162 = vpack.c.b16 %v158, %v157
    %v163 = vpack.c.b16 %v160, %v159
    %v164 = vpack.c.b16 %v161, %v161
    %vm167 = vcmask 326656
    %v169 = vsel %vm167, %v136, 0
    %v172 = vsel %vm167, %v137, 0
    %v175 = vsel %vm167, %v138, 0
    %v178 = vsel %vm167, %v139, 0
    %v181 = vsel %vm167, %v140, 0
    %v184 = vsel %vm167, %v141, 0
    %v187 = vsel %vm167, %v142, 0
    %v190 = vsel %vm167, %v143, 0
    %v193 = vsel %vm167, %v144, 0
    %v196 = vsel %vm167, %v145, 0
    %v199 = vsel %vm167, %v146, 0
    %v202 = vsel %vm167, %v147, 0
    %v205 = vsel %vm167, %v148, 0
    %v208 = vsel %vm167, %v149, 0
    %v211 = vsel %vm167, %v150, 0
    %v214 = vsel %vm167, %v151, 0
    %vm216 = vcmask 1043456
    %v218 = vsel %vm216, %v164, 0
    %220 = vmatprep.subr.bf16.mxu0 0
    %221 = vmatpush1.bf16.msra.mxu0 %v162
    %222 = vmatprep.subr.bf16.mxu0 0
    %223 = vmatpush1.bf16.msra.mxu0 %v163
    %224 = vmatprep.subr.bf16.mxu0 0
    %225 = vmatpush1.bf16.msra.mxu0 %v218
    %226 = vmatprep.subr.bf16.mxu0 0
    %227 = vmatpush1.bf16.msra.mxu0 0
    %228 = vmatprep.subr.bf16.mxu0 0
    %229 = vmatpush1.bf16.msra.mxu0 0
    %230 = vmatprep.subr.bf16.mxu0 0
    %231 = vmatpush1.bf16.msra.mxu0 0
    %232 = vmatprep.subr.bf16.mxu0 0
    %233 = vmatpush1.bf16.msra.mxu0 0
    %234 = vmatprep.subr.bf16.mxu0 0
    %235 = vmatpush1.bf16.msra.mxu0 0
    %236 = vmatprep.subr.bf16.mxu0 0
    %237 = vmatpush1.bf16.msra.mxu0 0
    %238 = vmatprep.subr.bf16.mxu0 0
    %239 = vmatpush1.bf16.msra.mxu0 0
    %240 = vmatprep.subr.bf16.mxu0 0
    %241 = vmatpush1.bf16.msra.mxu0 0
    %242 = vmatprep.subr.bf16.mxu0 0
    %243 = vmatpush1.bf16.msra.mxu0 0
    %244 = vmatprep.subr.bf16.mxu0 0
    %245 = vmatpush1.bf16.msra.mxu0 0
    %246 = vmatprep.subr.bf16.mxu0 0
    %247 = vmatpush1.bf16.msra.mxu0 0
    %248 = vmatprep.subr.bf16.mxu0 0
    %249 = vmatpush1.bf16.msra.mxu0 0
    %250 = vmatprep.subr.bf16.mxu0 0
    %251 = vmatpush1.bf16.msra.mxu0 0
    %252 = vmatprep.mubr.bf16.mxu0 0
    %253 = vmatmul.mubr.bf16.gmra.mrb[0].mxu0 %v169
    %v254 = vpop.f32.mrb[0].mxu0
    %v255 = vadd.f32 %v70, %v254
    %v256 = vpop.f32.mrb[0].mxu0
    %v257 = vpop.f32.mrb[0].mxu0
    %v258 = vadd.f32 %v70, %v257
    %v259 = vpop.f32.mrb[0].mxu0
    %260 = vmatprep.mubr.bf16.mxu0 0
    %261 = vmatmul.mubr.bf16.gmra.mrb[0].mxu0 %v172
    %v262 = vpop.f32.mrb[0].mxu0
    %v263 = vadd.f32 %v70, %v262
    %v264 = vpop.f32.mrb[0].mxu0
    %v265 = vpop.f32.mrb[0].mxu0
    %v266 = vadd.f32 %v70, %v265
    %v267 = vpop.f32.mrb[0].mxu0
    %268 = vmatprep.mubr.bf16.mxu0 0
    %269 = vmatmul.mubr.bf16.gmra.mrb[0].mxu0 %v175
    %v270 = vpop.f32.mrb[0].mxu0
    %v271 = vadd.f32 %v70, %v270
    %v272 = vpop.f32.mrb[0].mxu0
    %v273 = vpop.f32.mrb[0].mxu0
    %v274 = vadd.f32 %v70, %v273
    %v275 = vpop.f32.mrb[0].mxu0
    %276 = vmatprep.mubr.bf16.mxu0 0
    %277 = vmatmul.mubr.bf16.gmra.mrb[0].mxu0 %v178
    %v278 = vpop.f32.mrb[0].mxu0
    %v279 = vadd.f32 %v70, %v278
    %v280 = vpop.f32.mrb[0].mxu0
    %v281 = vpop.f32.mrb[0].mxu0
    %v282 = vadd.f32 %v70, %v281
    %v283 = vpop.f32.mrb[0].mxu0
    %284 = vmatprep.mubr.bf16.mxu0 0
    %285 = vmatmul.mubr.bf16.gmra.mrb[0].mxu0 %v181
    %v286 = vpop.f32.mrb[0].mxu0
    %v287 = vadd.f32 %v70, %v286
    %v288 = vpop.f32.mrb[0].mxu0
    %v289 = vpop.f32.mrb[0].mxu0
    %v290 = vadd.f32 %v70, %v289
    %v291 = vpop.f32.mrb[0].mxu0
    %292 = vmatprep.mubr.bf16.mxu0 0
    %293 = vmatmul.mubr.bf16.gmra.mrb[0].mxu0 %v184
    %v294 = vpop.f32.mrb[0].mxu0
    %v295 = vadd.f32 %v70, %v294
    %v296 = vpop.f32.mrb[0].mxu0
    %v297 = vpop.f32.mrb[0].mxu0
    %v298 = vadd.f32 %v70, %v297
    %v299 = vpop.f32.mrb[0].mxu0
    %300 = vmatprep.mubr.bf16.mxu0 0
    %301 = vmatmul.mubr.bf16.gmra.mrb[0].mxu0 %v187
    %v302 = vpop.f32.mrb[0].mxu0
    %v303 = vadd.f32 %v70, %v302
    %v304 = vpop.f32.mrb[0].mxu0
    %v305 = vpop.f32.mrb[0].mxu0
    %v306 = vadd.f32 %v70, %v305
    %v307 = vpop.f32.mrb[0].mxu0
    %308 = vmatprep.mubr.bf16.mxu0 0
    %309 = vmatmul.mubr.bf16.gmra.mrb[0].mxu0 %v190
    %v310 = vpop.f32.mrb[0].mxu0
    %v311 = vadd.f32 %v70, %v310
    %v312 = vpop.f32.mrb[0].mxu0
    %v313 = vpop.f32.mrb[0].mxu0
    %v314 = vadd.f32 %v70, %v313
    %v315 = vpop.f32.mrb[0].mxu0
    %316 = vmatprep.mubr.bf16.mxu0 0
    %317 = vmatmul.mubr.bf16.gmra.mrb[0].mxu0 %v193
    %v318 = vpop.f32.mrb[0].mxu0
    %v319 = vadd.f32 %v70, %v318
    %v320 = vpop.f32.mrb[0].mxu0
    %v321 = vpop.f32.mrb[0].mxu0
    %v322 = vadd.f32 %v70, %v321
    %v323 = vpop.f32.mrb[0].mxu0
    %324 = vmatprep.mubr.bf16.mxu0 0
    %325 = vmatmul.mubr.bf16.gmra.mrb[0].mxu0 %v196
    %v326 = vpop.f32.mrb[0].mxu0
    %v327 = vadd.f32 %v70, %v326
    %v328 = vpop.f32.mrb[0].mxu0
    %v329 = vpop.f32.mrb[0].mxu0
    %v330 = vadd.f32 %v70, %v329
    %v331 = vpop.f32.mrb[0].mxu0
    %332 = vmatprep.mubr.bf16.mxu0 0
    %333 = vmatmul.mubr.bf16.gmra.mrb[0].mxu0 %v199
    %v334 = vpop.f32.mrb[0].mxu0
    %v335 = vadd.f32 %v70, %v334
    %v336 = vpop.f32.mrb[0].mxu0
    %v337 = vpop.f32.mrb[0].mxu0
    %v338 = vadd.f32 %v70, %v337
    %v339 = vpop.f32.mrb[0].mxu0
    %340 = vmatprep.mubr.bf16.mxu0 0
    %341 = vmatmul.mubr.bf16.gmra.mrb[0].mxu0 %v202
    %v342 = vpop.f32.mrb[0].mxu0
    %v343 = vadd.f32 %v70, %v342
    %v344 = vpop.f32.mrb[0].mxu0
    %v345 = vpop.f32.mrb[0].mxu0
    %v346 = vadd.f32 %v70, %v345
    %v347 = vpop.f32.mrb[0].mxu0
    %348 = vmatprep.mubr.bf16.mxu0 0
    %349 = vmatmul.mubr.bf16.gmra.mrb[0].mxu0 %v205
    %v350 = vpop.f32.mrb[0].mxu0
    %v351 = vadd.f32 %v70, %v350
    %v352 = vpop.f32.mrb[0].mxu0
    %v353 = vpop.f32.mrb[0].mxu0
    %v354 = vadd.f32 %v70, %v353
    %v355 = vpop.f32.mrb[0].mxu0
    %356 = vmatprep.mubr.bf16.mxu0 0
    %357 = vmatmul.mubr.bf16.gmra.mrb[0].mxu0 %v208
    %v358 = vpop.f32.mrb[0].mxu0
    %v359 = vadd.f32 %v70, %v358
    %v360 = vpop.f32.mrb[0].mxu0
    %v361 = vpop.f32.mrb[0].mxu0
    %v362 = vadd.f32 %v70, %v361
    %v363 = vpop.f32.mrb[0].mxu0
    %364 = vmatprep.mubr.bf16.mxu0 0
    %365 = vmatmul.mubr.bf16.gmra.mrb[0].mxu0 %v211
    %v366 = vpop.f32.mrb[0].mxu0
    %v367 = vadd.f32 %v70, %v366
    %v368 = vpop.f32.mrb[0].mxu0
    %v369 = vpop.f32.mrb[0].mxu0
    %v370 = vadd.f32 %v70, %v369
    %v371 = vpop.f32.mrb[0].mxu0
    %372 = vmatprep.mubr.bf16.mxu0 0
    %373 = vmatmul.mubr.bf16.gmra.mrb[0].mxu0 %v214
    %v374 = vpop.f32.mrb[0].mxu0
    %v375 = vadd.f32 %v70, %v374
    %v376 = vpop.f32.mrb[0].mxu0
    %v377 = vpop.f32.mrb[0].mxu0
    %v378 = vadd.f32 %v70, %v377
    %v379 = vpop.f32.mrb[0].mxu0
    %380 = vdwg.mxu0
    %v381 = vmax.f32 %v255, 0.0
    %v382 = vmax.f32 %v258, 0.0
    %v383 = vmax.f32 %v263, 0.0
    %v384 = vmax.f32 %v266, 0.0
    %v385 = vmax.f32 %v271, 0.0
    %v386 = vmax.f32 %v274, 0.0
    %v387 = vmax.f32 %v279, 0.0
    %v388 = vmax.f32 %v282, 0.0
    %v389 = vmax.f32 %v287, 0.0
    %v390 = vmax.f32 %v290, 0.0
    %v391 = vmax.f32 %v295, 0.0
    %v392 = vmax.f32 %v298, 0.0
    %v393 = vmax.f32 %v303, 0.0
    %v394 = vmax.f32 %v306, 0.0
    %v395 = vmax.f32 %v311, 0.0
    %v396 = vmax.f32 %v314, 0.0
    %v397 = vmax.f32 %v319, 0.0
    %v398 = vmax.f32 %v322, 0.0
    %v399 = vmax.f32 %v327, 0.0
    %v400 = vmax.f32 %v330, 0.0
    %v401 = vmax.f32 %v335, 0.0
    %v402 = vmax.f32 %v338, 0.0
    %v403 = vmax.f32 %v343, 0.0
    %v404 = vmax.f32 %v346, 0.0
    %v405 = vmax.f32 %v351, 0.0
    %v406 = vmax.f32 %v354, 0.0
    %v407 = vmax.f32 %v359, 0.0
    %v408 = vmax.f32 %v362, 0.0
    %v409 = vmax.f32 %v367, 0.0
    %v410 = vmax.f32 %v370, 0.0
    %v411 = vmax.f32 %v375, 0.0
    %v412 = vmax.f32 %v378, 0.0
    %v413 = vadd.f32 %v381, %v382
    %v414 = vadd.f32 %v413, %v383
    %v415 = vadd.f32 %v414, %v384
    %v416 = vadd.f32 %v415, %v385
    %v417 = vadd.f32 %v416, %v386
    %v418 = vadd.f32 %v417, %v387
    %v419 = vadd.f32 %v418, %v388
    %v420 = vadd.f32 %v419, %v389
    %v421 = vadd.f32 %v420, %v390
    %v422 = vadd.f32 %v421, %v391
    %v423 = vadd.f32 %v422, %v392
    %v424 = vadd.f32 %v423, %v393
    %v425 = vadd.f32 %v424, %v394
    %v426 = vadd.f32 %v425, %v395
    %v427 = vadd.f32 %v426, %v396
    %v428 = vadd.f32 %v427, %v397
    %v429 = vadd.f32 %v428, %v398
    %v430 = vadd.f32 %v429, %v399
    %v431 = vadd.f32 %v430, %v400
    %v432 = vadd.f32 %v431, %v401
    %v433 = vadd.f32 %v432, %v402
    %v434 = vadd.f32 %v433, %v403
    %v435 = vadd.f32 %v434, %v404
    %v436 = vadd.f32 %v435, %v405
    %v437 = vadd.f32 %v436, %v406
    %v438 = vadd.f32 %v437, %v407
    %v439 = vadd.f32 %v438, %v408
    %v440 = vadd.f32 %v439, %v409
    %v441 = vadd.f32 %v440, %v410
    %v442 = vadd.f32 %v441, %v411
    %v443 = vadd.f32 %v442, %v412
    %v444 = vrot.slane %v443, 4
    %v445 = vadd.f32 %v443, %v444
    %v446 = vrot.slane %v445, 2
    %v447 = vadd.f32 %v445, %v446
    %v448 = vrot.slane %v447, 1
    %v449 = vadd.f32 %v447, %v448
    %v450 = vld [vmem:[%s0 + $0x80] sm:$0xf]
    %v451 = vld [vmem:[%s0 + $0x84] sm:$0xf]
    %v452 = vld [vmem:[%s0 + $0x88] sm:$0xf]
    %v453 = vld [vmem:[%s0 + $0x8c] sm:$0xf]
    %v454 = vld [vmem:[%s0 + $0x90] sm:$0xf]
    %v455 = vld [vmem:[%s0 + $0x94] sm:$0xf]
    %v456 = vld [vmem:[%s0 + $0x98] sm:$0xf]
    %v457 = vld [vmem:[%s0 + $0x9c] sm:$0xf]
    %v458 = vld [vmem:[%s0 + $0xa0] sm:$0xf]
    %v459 = vld [vmem:[%s0 + $0xa4] sm:$0xf]
    %v460 = vld [vmem:[%s0 + $0xa8] sm:$0xf]
    %v461 = vld [vmem:[%s0 + $0xac] sm:$0xf]
    %v462 = vld [vmem:[%s0 + $0xb0] sm:$0xf]
    %v463 = vld [vmem:[%s0 + $0xb4] sm:$0xf]
    %v464 = vld [vmem:[%s0 + $0xb8] sm:$0xf]
    %v465 = vld [vmem:[%s0 + $0xbc] sm:$0xf]
    %v466 = vld [vmem:[%s0 + $0xc0] sm:$0xf]
    %v467 = vld [vmem:[%s0 + $0xc4] sm:$0xf]
    %v468 = vld [vmem:[%s0 + $0xc8] sm:$0xf]
    %v469 = vld [vmem:[%s0 + $0xcc] sm:$0xf]
    %v470 = vld [vmem:[%s0 + $0xd0] sm:$0xf]
    %v471 = vld [vmem:[%s0 + $0xd4] sm:$0xf]
    %v472 = vld [vmem:[%s0 + $0xd8] sm:$0xf]
    %v473 = vld [vmem:[%s0 + $0xdc] sm:$0xf]
    %v474 = vld [vmem:[%s0 + $0xe0] sm:$0xf]
    %v475 = vld [vmem:[%s0 + $0xe4] sm:$0xf]
    %v476 = vld [vmem:[%s0 + $0xe8] sm:$0xf]
    %v477 = vld [vmem:[%s0 + $0xec] sm:$0xf]
    %v478 = vld [vmem:[%s0 + $0xf0] sm:$0xf]
    %v479 = vld [vmem:[%s0 + $0xf4] sm:$0xf]
    %v480 = vld [vmem:[%s0 + $0xf8] sm:$0xf]
    %v481 = vld [vmem:[%s0 + $0xfc] sm:$0xf]
    %v514 = vunpack.c.l.b16 %v450
    %v515 = vunpack.c.l.b16 %v451
    %v516 = vunpack.c.l.b16 %v452
    %v517 = vunpack.c.l.b16 %v453
    %v518 = vunpack.c.l.b16 %v454
    %v519 = vunpack.c.l.b16 %v455
    %v520 = vunpack.c.l.b16 %v456
    %v521 = vunpack.c.l.b16 %v457
    %v522 = vunpack.c.l.b16 %v458
    %v523 = vunpack.c.l.b16 %v459
    %v524 = vunpack.c.l.b16 %v460
    %v525 = vunpack.c.l.b16 %v461
    %v526 = vunpack.c.l.b16 %v462
    %v527 = vunpack.c.l.b16 %v463
    %v528 = vunpack.c.l.b16 %v464
    %v529 = vunpack.c.l.b16 %v465
    %v530 = vunpack.c.l.b16 %v466
    %v531 = vunpack.c.l.b16 %v467
    %v532 = vunpack.c.l.b16 %v468
    %v533 = vunpack.c.l.b16 %v469
    %v534 = vunpack.c.l.b16 %v470
    %v535 = vunpack.c.l.b16 %v471
    %v536 = vunpack.c.l.b16 %v472
    %v537 = vunpack.c.l.b16 %v473
    %v538 = vunpack.c.l.b16 %v474
    %v539 = vunpack.c.l.b16 %v475
    %v540 = vunpack.c.l.b16 %v476
    %v541 = vunpack.c.l.b16 %v477
    %v542 = vunpack.c.l.b16 %v478
    %v543 = vunpack.c.l.b16 %v479
    %v544 = vunpack.c.l.b16 %v480
    %v545 = vunpack.c.l.b16 %v481
    %v546 = vpack.c.b16 %v515, %v514
    %v547 = vpack.c.b16 %v517, %v516
    %v548 = vpack.c.b16 %v519, %v518
    %v549 = vpack.c.b16 %v521, %v520
    %v550 = vpack.c.b16 %v523, %v522
    %v551 = vpack.c.b16 %v525, %v524
    %v552 = vpack.c.b16 %v527, %v526
    %v553 = vpack.c.b16 %v529, %v528
    %v554 = vpack.c.b16 %v531, %v530
    %v555 = vpack.c.b16 %v533, %v532
    %v556 = vpack.c.b16 %v535, %v534
    %v557 = vpack.c.b16 %v537, %v536
    %v558 = vpack.c.b16 %v539, %v538
    %v559 = vpack.c.b16 %v541, %v540
    %v560 = vpack.c.b16 %v543, %v542
    %v561 = vpack.c.b16 %v545, %v544
    %v563 = vsel %vm167, %v546, 0
    %v566 = vsel %vm167, %v547, 0
    %v569 = vsel %vm167, %v548, 0
    %v572 = vsel %vm167, %v549, 0
    %v575 = vsel %vm167, %v550, 0
    %v578 = vsel %vm167, %v551, 0
    %v581 = vsel %vm167, %v552, 0
    %v584 = vsel %vm167, %v553, 0
    %v587 = vsel %vm167, %v554, 0
    %v590 = vsel %vm167, %v555, 0
    %v593 = vsel %vm167, %v556, 0
    %v596 = vsel %vm167, %v557, 0
    %v599 = vsel %vm167, %v558, 0
    %v602 = vsel %vm167, %v559, 0
    %v605 = vsel %vm167, %v560, 0
    %v608 = vsel %vm167, %v561, 0
    %610 = vmatprep.subr.bf16.mxu0 0
    %611 = vmatpush1.bf16.msra.mxu0 %v162
    %612 = vmatprep.subr.bf16.mxu0 0
    %613 = vmatpush1.bf16.msra.mxu0 %v163
    %614 = vmatprep.subr.bf16.mxu0 0
    %615 = vmatpush1.bf16.msra.mxu0 %v218
    %616 = vmatprep.subr.bf16.mxu0 0
    %617 = vmatpush1.bf16.msra.mxu0 0
    %618 = vmatprep.subr.bf16.mxu0 0
    %619 = vmatpush1.bf16.msra.mxu0 0
    %620 = vmatprep.subr.bf16.mxu0 0
    %621 = vmatpush1.bf16.msra.mxu0 0
    %622 = vmatprep.subr.bf16.mxu0 0
    %623 = vmatpush1.bf16.msra.mxu0 0
    %624 = vmatprep.subr.bf16.mxu0 0
    %625 = vmatpush1.bf16.msra.mxu0 0
    %626 = vmatprep.subr.bf16.mxu0 0
    %627 = vmatpush1.bf16.msra.mxu0 0
    %628 = vmatprep.subr.bf16.mxu0 0
    %629 = vmatpush1.bf16.msra.mxu0 0
    %630 = vmatprep.subr.bf16.mxu0 0
    %631 = vmatpush1.bf16.msra.mxu0 0
    %632 = vmatprep.subr.bf16.mxu0 0
    %633 = vmatpush1.bf16.msra.mxu0 0
    %634 = vmatprep.subr.bf16.mxu0 0
    %635 = vmatpush1.bf16.msra.mxu0 0
    %636 = vmatprep.subr.bf16.mxu0 0
    %637 = vmatpush1.bf16.msra.mxu0 0
    %638 = vmatprep.subr.bf16.mxu0 0
    %639 = vmatpush1.bf16.msra.mxu0 0
    %640 = vmatprep.subr.bf16.mxu0 0
    %641 = vmatpush1.bf16.msra.mxu0 0
    %642 = vmatprep.mubr.bf16.mxu0 0
    %643 = vmatmul.mubr.bf16.gmra.mrb[0].mxu0 %v563
    %v644 = vpop.f32.mrb[0].mxu0
    %v645 = vadd.f32 %v70, %v644
    %v646 = vpop.f32.mrb[0].mxu0
    %v647 = vpop.f32.mrb[0].mxu0
    %v648 = vadd.f32 %v70, %v647
    %v649 = vpop.f32.mrb[0].mxu0
    %650 = vmatprep.mubr.bf16.mxu0 0
    %651 = vmatmul.mubr.bf16.gmra.mrb[0].mxu0 %v566
    %v652 = vpop.f32.mrb[0].mxu0
    %v653 = vadd.f32 %v70, %v652
    %v654 = vpop.f32.mrb[0].mxu0
    %v655 = vpop.f32.mrb[0].mxu0
    %v656 = vadd.f32 %v70, %v655
    %v657 = vpop.f32.mrb[0].mxu0
    %658 = vmatprep.mubr.bf16.mxu0 0
    %659 = vmatmul.mubr.bf16.gmra.mrb[0].mxu0 %v569
    %v660 = vpop.f32.mrb[0].mxu0
    %v661 = vadd.f32 %v70, %v660
    %v662 = vpop.f32.mrb[0].mxu0
    %v663 = vpop.f32.mrb[0].mxu0
    %v664 = vadd.f32 %v70, %v663
    %v665 = vpop.f32.mrb[0].mxu0
    %666 = vmatprep.mubr.bf16.mxu0 0
    %667 = vmatmul.mubr.bf16.gmra.mrb[0].mxu0 %v572
    %v668 = vpop.f32.mrb[0].mxu0
    %v669 = vadd.f32 %v70, %v668
    %v670 = vpop.f32.mrb[0].mxu0
    %v671 = vpop.f32.mrb[0].mxu0
    %v672 = vadd.f32 %v70, %v671
    %v673 = vpop.f32.mrb[0].mxu0
    %674 = vmatprep.mubr.bf16.mxu0 0
    %675 = vmatmul.mubr.bf16.gmra.mrb[0].mxu0 %v575
    %v676 = vpop.f32.mrb[0].mxu0
    %v677 = vadd.f32 %v70, %v676
    %v678 = vpop.f32.mrb[0].mxu0
    %v679 = vpop.f32.mrb[0].mxu0
    %v680 = vadd.f32 %v70, %v679
    %v681 = vpop.f32.mrb[0].mxu0
    %682 = vmatprep.mubr.bf16.mxu0 0
    %683 = vmatmul.mubr.bf16.gmra.mrb[0].mxu0 %v578
    %v684 = vpop.f32.mrb[0].mxu0
    %v685 = vadd.f32 %v70, %v684
    %v686 = vpop.f32.mrb[0].mxu0
    %v687 = vpop.f32.mrb[0].mxu0
    %v688 = vadd.f32 %v70, %v687
    %v689 = vpop.f32.mrb[0].mxu0
    %690 = vmatprep.mubr.bf16.mxu0 0
    %691 = vmatmul.mubr.bf16.gmra.mrb[0].mxu0 %v581
    %v692 = vpop.f32.mrb[0].mxu0
    %v693 = vadd.f32 %v70, %v692
    %v694 = vpop.f32.mrb[0].mxu0
    %v695 = vpop.f32.mrb[0].mxu0
    %v696 = vadd.f32 %v70, %v695
    %v697 = vpop.f32.mrb[0].mxu0
    %698 = vmatprep.mubr.bf16.mxu0 0
    %699 = vmatmul.mubr.bf16.gmra.mrb[0].mxu0 %v584
    %v700 = vpop.f32.mrb[0].mxu0
    %v701 = vadd.f32 %v70, %v700
    %v702 = vpop.f32.mrb[0].mxu0
    %v703 = vpop.f32.mrb[0].mxu0
    %v704 = vadd.f32 %v70, %v703
    %v705 = vpop.f32.mrb[0].mxu0
    %706 = vmatprep.mubr.bf16.mxu0 0
    %707 = vmatmul.mubr.bf16.gmra.mrb[0].mxu0 %v587
    %v708 = vpop.f32.mrb[0].mxu0
    %v709 = vadd.f32 %v70, %v708
    %v710 = vpop.f32.mrb[0].mxu0
    %v711 = vpop.f32.mrb[0].mxu0
    %v712 = vadd.f32 %v70, %v711
    %v713 = vpop.f32.mrb[0].mxu0
    %714 = vmatprep.mubr.bf16.mxu0 0
    %715 = vmatmul.mubr.bf16.gmra.mrb[0].mxu0 %v590
    %v716 = vpop.f32.mrb[0].mxu0
    %v717 = vadd.f32 %v70, %v716
    %v718 = vpop.f32.mrb[0].mxu0
    %v719 = vpop.f32.mrb[0].mxu0
    %v720 = vadd.f32 %v70, %v719
    %v721 = vpop.f32.mrb[0].mxu0
    %722 = vmatprep.mubr.bf16.mxu0 0
    %723 = vmatmul.mubr.bf16.gmra.mrb[0].mxu0 %v593
    %v724 = vpop.f32.mrb[0].mxu0
    %v725 = vadd.f32 %v70, %v724
    %v726 = vpop.f32.mrb[0].mxu0
    %v727 = vpop.f32.mrb[0].mxu0
    %v728 = vadd.f32 %v70, %v727
    %v729 = vpop.f32.mrb[0].mxu0
    %730 = vmatprep.mubr.bf16.mxu0 0
    %731 = vmatmul.mubr.bf16.gmra.mrb[0].mxu0 %v596
    %v732 = vpop.f32.mrb[0].mxu0
    %v733 = vadd.f32 %v70, %v732
    %v734 = vpop.f32.mrb[0].mxu0
    %v735 = vpop.f32.mrb[0].mxu0
    %v736 = vadd.f32 %v70, %v735
    %v737 = vpop.f32.mrb[0].mxu0
    %738 = vmatprep.mubr.bf16.mxu0 0
    %739 = vmatmul.mubr.bf16.gmra.mrb[0].mxu0 %v599
    %v740 = vpop.f32.mrb[0].mxu0
    %v741 = vadd.f32 %v70, %v740
    %v742 = vpop.f32.mrb[0].mxu0
    %v743 = vpop.f32.mrb[0].mxu0
    %v744 = vadd.f32 %v70, %v743
    %v745 = vpop.f32.mrb[0].mxu0
    %746 = vmatprep.mubr.bf16.mxu0 0
    %747 = vmatmul.mubr.bf16.gmra.mrb[0].mxu0 %v602
    %v748 = vpop.f32.mrb[0].mxu0
    %v749 = vadd.f32 %v70, %v748
    %v750 = vpop.f32.mrb[0].mxu0
    %v751 = vpop.f32.mrb[0].mxu0
    %v752 = vadd.f32 %v70, %v751
    %v753 = vpop.f32.mrb[0].mxu0
    %754 = vmatprep.mubr.bf16.mxu0 0
    %755 = vmatmul.mubr.bf16.gmra.mrb[0].mxu0 %v605
    %v756 = vpop.f32.mrb[0].mxu0
    %v757 = vadd.f32 %v70, %v756
    %v758 = vpop.f32.mrb[0].mxu0
    %v759 = vpop.f32.mrb[0].mxu0
    %v760 = vadd.f32 %v70, %v759
    %v761 = vpop.f32.mrb[0].mxu0
    %762 = vmatprep.mubr.bf16.mxu0 0
    %763 = vmatmul.mubr.bf16.gmra.mrb[0].mxu0 %v608
    %v764 = vpop.f32.mrb[0].mxu0
    %v765 = vadd.f32 %v70, %v764
    %v766 = vpop.f32.mrb[0].mxu0
    %v767 = vpop.f32.mrb[0].mxu0
    %v768 = vadd.f32 %v70, %v767
    %v769 = vpop.f32.mrb[0].mxu0
    %770 = vdwg.mxu0
    %v771 = vmax.f32 %v645, 0.0
    %v772 = vmax.f32 %v648, 0.0
    %v773 = vmax.f32 %v653, 0.0
    %v774 = vmax.f32 %v656, 0.0
    %v775 = vmax.f32 %v661, 0.0
    %v776 = vmax.f32 %v664, 0.0
    %v777 = vmax.f32 %v669, 0.0
    %v778 = vmax.f32 %v672, 0.0
    %v779 = vmax.f32 %v677, 0.0
    %v780 = vmax.f32 %v680, 0.0
    %v781 = vmax.f32 %v685, 0.0
    %v782 = vmax.f32 %v688, 0.0
    %v783 = vmax.f32 %v693, 0.0
    %v784 = vmax.f32 %v696, 0.0
    %v785 = vmax.f32 %v701, 0.0
    %v786 = vmax.f32 %v704, 0.0
    %v787 = vmax.f32 %v709, 0.0
    %v788 = vmax.f32 %v712, 0.0
    %v789 = vmax.f32 %v717, 0.0
    %v790 = vmax.f32 %v720, 0.0
    %v791 = vmax.f32 %v725, 0.0
    %v792 = vmax.f32 %v728, 0.0
    %v793 = vmax.f32 %v733, 0.0
    %v794 = vmax.f32 %v736, 0.0
    %v795 = vmax.f32 %v741, 0.0
    %v796 = vmax.f32 %v744, 0.0
    %v797 = vmax.f32 %v749, 0.0
    %v798 = vmax.f32 %v752, 0.0
    %v799 = vmax.f32 %v757, 0.0
    %v800 = vmax.f32 %v760, 0.0
    %v801 = vmax.f32 %v765, 0.0
    %v802 = vmax.f32 %v768, 0.0
    %v803 = vadd.f32 %v771, %v772
    %v804 = vadd.f32 %v803, %v773
    %v805 = vadd.f32 %v804, %v774
    %v806 = vadd.f32 %v805, %v775
    %v807 = vadd.f32 %v806, %v776
    %v808 = vadd.f32 %v807, %v777
    %v809 = vadd.f32 %v808, %v778
    %v810 = vadd.f32 %v809, %v779
    %v811 = vadd.f32 %v810, %v780
    %v812 = vadd.f32 %v811, %v781
    %v813 = vadd.f32 %v812, %v782
    %v814 = vadd.f32 %v813, %v783
    %v815 = vadd.f32 %v814, %v784
    %v816 = vadd.f32 %v815, %v785
    %v817 = vadd.f32 %v816, %v786
    %v818 = vadd.f32 %v817, %v787
    %v819 = vadd.f32 %v818, %v788
    %v820 = vadd.f32 %v819, %v789
    %v821 = vadd.f32 %v820, %v790
    %v822 = vadd.f32 %v821, %v791
    %v823 = vadd.f32 %v822, %v792
    %v824 = vadd.f32 %v823, %v793
    %v825 = vadd.f32 %v824, %v794
    %v826 = vadd.f32 %v825, %v795
    %v827 = vadd.f32 %v826, %v796
    %v828 = vadd.f32 %v827, %v797
    %v829 = vadd.f32 %v828, %v798
    %v830 = vadd.f32 %v829, %v799
    %v831 = vadd.f32 %v830, %v800
    %v832 = vadd.f32 %v831, %v801
    %v833 = vadd.f32 %v832, %v802
    %v834 = vrot.slane %v833, 4
    %v835 = vadd.f32 %v833, %v834
    %v836 = vrot.slane %v835, 2
    %v837 = vadd.f32 %v835, %v836
    %v838 = vrot.slane %v837, 1
    %v839 = vadd.f32 %v837, %v838
    %vm840 = vcmask 1040384
    %v841 = vsel %vm840, %v449, %v839
    %v842 = vmul.f32 %v841, 0.00390625
    %v843 = vld [vmem:[%s3] sm:$0xff]
    %v844 = vld [vmem:[%s3 + $0x8] sm:$0xff]
    %v845 = vld [vmem:[%s3 + $0x10] sm:$0xff]
    %v846 = vld [vmem:[%s3 + $0x18] sm:$0xff]
    %v847 = vld [vmem:[%s3 + $0x20] sm:$0xff]
    %v848 = vld [vmem:[%s3 + $0x28] sm:$0xff]
    %v849 = vld [vmem:[%s3 + $0x30] sm:$0xff]
    %v850 = vld [vmem:[%s3 + $0x38] sm:$0xff]
    %v851 = vld [vmem:[%s3 + $0x40] sm:$0xff]
    %v852 = vld [vmem:[%s3 + $0x48] sm:$0xff]
    %v853 = vld [vmem:[%s3 + $0x50] sm:$0xff]
    %v854 = vld [vmem:[%s3 + $0x58] sm:$0xff]
    %v855 = vld [vmem:[%s3 + $0x60] sm:$0xff]
    %v856 = vld [vmem:[%s3 + $0x68] sm:$0xff]
    %v857 = vld [vmem:[%s3 + $0x70] sm:$0xff]
    %v858 = vld [vmem:[%s3 + $0x78] sm:$0xff]
    %v859 = vld [vmem:[%s4] sm:$0x1]
    %v861 = vlaneseq
    %v862 = vshrl.u32 %v861, 7
    %v863 = vsub.s32 0, %v862
    %v864 = vrot.slane %v859, %v863
    %866 = vmatprep.subr.mxu0 0.0
    %867 = vmatpush1.msra.mxu0 %v843
    %868 = vmatprep.subr.mxu0 0.0
    %869 = vmatpush1.msra.mxu0 %v844
    %870 = vmatprep.subr.mxu0 0.0
    %871 = vmatpush1.msra.mxu0 %v845
    %872 = vmatprep.subr.mxu0 0.0
    %873 = vmatpush1.msra.mxu0 %v846
    %874 = vmatprep.subr.mxu0 0.0
    %875 = vmatpush1.msra.mxu0 %v847
    %876 = vmatprep.subr.mxu0 0.0
    %877 = vmatpush1.msra.mxu0 %v848
    %878 = vmatprep.subr.mxu0 0.0
    %879 = vmatpush1.msra.mxu0 %v849
    %880 = vmatprep.subr.mxu0 0.0
    %881 = vmatpush1.msra.mxu0 %v850
    %882 = vmatprep.subr.mxu0 0.0
    %883 = vmatpush1.msra.mxu0 %v851
    %884 = vmatprep.subr.mxu0 0.0
    %885 = vmatpush1.msra.mxu0 %v852
    %886 = vmatprep.subr.mxu0 0.0
    %887 = vmatpush1.msra.mxu0 %v853
    %888 = vmatprep.subr.mxu0 0.0
    %889 = vmatpush1.msra.mxu0 %v854
    %890 = vmatprep.subr.mxu0 0.0
    %891 = vmatpush1.msra.mxu0 %v855
    %892 = vmatprep.subr.mxu0 0.0
    %893 = vmatpush1.msra.mxu0 %v856
    %894 = vmatprep.subr.mxu0 0.0
    %895 = vmatpush1.msra.mxu0 %v857
    %896 = vmatprep.subr.mxu0 0.0
    %897 = vmatpush1.msra.mxu0 %v858
    %898 = vmatprep.subr.mxu0 0.0
    %899 = vmatpush1.msra.mxu0 0.0
    %900 = vmatprep.subr.mxu0 0.0
    %901 = vmatpush1.msra.mxu0 0.0
    %902 = vmatprep.subr.mxu0 0.0
    %903 = vmatpush1.msra.mxu0 0.0
    %904 = vmatprep.subr.mxu0 0.0
    %905 = vmatpush1.msra.mxu0 0.0
    %906 = vmatprep.subr.mxu0 0.0
    %907 = vmatpush1.msra.mxu0 0.0
    %908 = vmatprep.subr.mxu0 0.0
    %909 = vmatpush1.msra.mxu0 0.0
    %910 = vmatprep.subr.mxu0 0.0
    %911 = vmatpush1.msra.mxu0 0.0
    %912 = vmatprep.subr.mxu0 0.0
    %913 = vmatpush1.msra.mxu0 0.0
    %914 = vmatprep.subr.mxu0 0.0
    %915 = vmatpush1.msra.mxu0 0.0
    %916 = vmatprep.subr.mxu0 0.0
    %917 = vmatpush1.msra.mxu0 0.0
    %918 = vmatprep.subr.mxu0 0.0
    %919 = vmatpush1.msra.mxu0 0.0
    %920 = vmatprep.subr.mxu0 0.0
    %921 = vmatpush1.msra.mxu0 0.0
    %922 = vmatprep.subr.mxu0 0.0
    %923 = vmatpush1.msra.mxu0 0.0
    %924 = vmatprep.subr.mxu0 0.0
    %925 = vmatpush1.msra.mxu0 0.0
    %926 = vmatprep.subr.mxu0 0.0
    %927 = vmatpush1.msra.mxu0 0.0
    %928 = vmatprep.subr.mxu0 0.0
    %929 = vmatpush1.msra.mxu0 0.0
    %930 = vmatprep.mubr.f32.mxu0 0.0
    %931 = vmatmul.mubr.f32.gmra.mrb[0].mxu0 %v842
    %v932 = vpop.f32.mrb[0].mxu0
    %v933 = vadd.f32 %v864, %v932
    %v934 = vpop.f32.mrb[0].mxu0
    %935 = vdwg.mxu0
    %v936 = vmax.f32 %v933, 0.0
    %v937 = vld [vmem:[%s5] sm:$0xff]
    %v938 = vld [vmem:[%s5 + $0x8] sm:$0xff]
    %v939 = vld [vmem:[%s5 + $0x10] sm:$0xff]
    %v940 = vld [vmem:[%s5 + $0x18] sm:$0xff]
    %v941 = vld [vmem:[%s5 + $0x20] sm:$0xff]
    %v942 = vld [vmem:[%s5 + $0x28] sm:$0xff]
    %v943 = vld [vmem:[%s5 + $0x30] sm:$0xff]
    %v944 = vld [vmem:[%s5 + $0x38] sm:$0xff]
    %v945 = vld [vmem:[%s5 + $0x40] sm:$0xff]
    %v946 = vld [vmem:[%s5 + $0x48] sm:$0xff]
    %v947 = vld [vmem:[%s5 + $0x50] sm:$0xff]
    %v948 = vld [vmem:[%s5 + $0x58] sm:$0xff]
    %v949 = vld [vmem:[%s5 + $0x60] sm:$0xff]
    %v950 = vld [vmem:[%s5 + $0x68] sm:$0xff]
    %v951 = vld [vmem:[%s5 + $0x70] sm:$0xff]
    %v952 = vld [vmem:[%s5 + $0x78] sm:$0xff]
    %v953 = vld [vmem:[%s6] sm:$0x1]
    %v955 = vlaneseq
    %v956 = vshrl.u32 %v955, 7
    %v957 = vsub.s32 0, %v956
    %v958 = vrot.slane %v953, %v957
    %960 = vmatprep.subr.mxu0 0.0
    %961 = vmatpush1.msra.mxu0 %v937
    %962 = vmatprep.subr.mxu0 0.0
    %963 = vmatpush1.msra.mxu0 %v938
    %964 = vmatprep.subr.mxu0 0.0
    %965 = vmatpush1.msra.mxu0 %v939
    %966 = vmatprep.subr.mxu0 0.0
    %967 = vmatpush1.msra.mxu0 %v940
    %968 = vmatprep.subr.mxu0 0.0
    %969 = vmatpush1.msra.mxu0 %v941
    %970 = vmatprep.subr.mxu0 0.0
    %971 = vmatpush1.msra.mxu0 %v942
    %972 = vmatprep.subr.mxu0 0.0
    %973 = vmatpush1.msra.mxu0 %v943
    %974 = vmatprep.subr.mxu0 0.0
    %975 = vmatpush1.msra.mxu0 %v944
    %976 = vmatprep.subr.mxu0 0.0
    %977 = vmatpush1.msra.mxu0 %v945
    %978 = vmatprep.subr.mxu0 0.0
    %979 = vmatpush1.msra.mxu0 %v946
    %980 = vmatprep.subr.mxu0 0.0
    %981 = vmatpush1.msra.mxu0 %v947
    %982 = vmatprep.subr.mxu0 0.0
    %983 = vmatpush1.msra.mxu0 %v948
    %984 = vmatprep.subr.mxu0 0.0
    %985 = vmatpush1.msra.mxu0 %v949
    %986 = vmatprep.subr.mxu0 0.0
    %987 = vmatpush1.msra.mxu0 %v950
    %988 = vmatprep.subr.mxu0 0.0
    %989 = vmatpush1.msra.mxu0 %v951
    %990 = vmatprep.subr.mxu0 0.0
    %991 = vmatpush1.msra.mxu0 %v952
    %992 = vmatprep.subr.mxu0 0.0
    %993 = vmatpush1.msra.mxu0 0.0
    %994 = vmatprep.subr.mxu0 0.0
    %995 = vmatpush1.msra.mxu0 0.0
    %996 = vmatprep.subr.mxu0 0.0
    %997 = vmatpush1.msra.mxu0 0.0
    %998 = vmatprep.subr.mxu0 0.0
    %999 = vmatpush1.msra.mxu0 0.0
    %1000 = vmatprep.subr.mxu0 0.0
    %1001 = vmatpush1.msra.mxu0 0.0
    %1002 = vmatprep.subr.mxu0 0.0
    %1003 = vmatpush1.msra.mxu0 0.0
    %1004 = vmatprep.subr.mxu0 0.0
    %1005 = vmatpush1.msra.mxu0 0.0
    %1006 = vmatprep.subr.mxu0 0.0
    %1007 = vmatpush1.msra.mxu0 0.0
    %1008 = vmatprep.subr.mxu0 0.0
    %1009 = vmatpush1.msra.mxu0 0.0
    %1010 = vmatprep.subr.mxu0 0.0
    %1011 = vmatpush1.msra.mxu0 0.0
    %1012 = vmatprep.subr.mxu0 0.0
    %1013 = vmatpush1.msra.mxu0 0.0
    %1014 = vmatprep.subr.mxu0 0.0
    %1015 = vmatpush1.msra.mxu0 0.0
    %1016 = vmatprep.subr.mxu0 0.0
    %1017 = vmatpush1.msra.mxu0 0.0
    %1018 = vmatprep.subr.mxu0 0.0
    %1019 = vmatpush1.msra.mxu0 0.0
    %1020 = vmatprep.subr.mxu0 0.0
    %1021 = vmatpush1.msra.mxu0 0.0
    %1022 = vmatprep.subr.mxu0 0.0
    %1023 = vmatpush1.msra.mxu0 0.0
    %1024 = vmatprep.mubr.f32.mxu0 0.0
    %1025 = vmatmul.mubr.f32.gmra.mrb[0].mxu0 %v936
    %v1026 = vpop.f32.mrb[0].mxu0
    %v1027 = vadd.f32 %v958, %v1026
    %v1028 = vpop.f32.mrb[0].mxu0
    %1029 = vdwg.mxu0
    %v1030 = vmul.f32 %v1027, %v1027
    %vm1031 = vcmask 1041408
    %v1032 = vsel %vm1031, %v1030, 0.0
    %1033 = vadd.xlane.f32.xlu0 %v1032
    %v1034 = vpop.xlane.xlu0 %1033
    %v1035 = vmax.f32 %v1034, 1e-24
    %v1036 = vrsqrt.pop %v1035
    %v1037 = vmul.f32 %v1027, %v1036
    %1038 = vst [vmem:[#allocation2] sm:$0x3] %v1037
    // Predicated region
    $region30: #{contrastive_forward.1} parent=1 // pred_check
      _
    $region31: #{contrastive_forward.1} parent=1 // pred_check_branch
      %1040 = sbr.rel (0) target = $region33
    $region32: #{contrastive_forward.1} parent=1 // pred_region
      %s1042 = ssub.s32 32, 32
      %1043 = vsyncadd [#allocation3], %s1042
      %s1045 = sshll.u32 [#allocation2], 4
      %s1046 = int_to_ptr.vmem [resolvable:$true] %s1045
      %1048 = dma.vmem_to_hbm [thread:$0]  %s1046, 32, %s7, [#allocation3]
    $region33: #{contrastive_forward.1} parent=1 // pred_fallthru
      _
    // Predicated region
    $region34: #{contrastive_forward.1} parent=1 // pred_check
      _
    $region35: #{contrastive_forward.1} parent=1 // pred_check_branch
      %1050 = sbr.rel (0) target = $region37
    $region36: #{contrastive_forward.1} parent=1 // pred_region
      %1051 = dma.done [#allocation3], 32
    $region37: #{contrastive_forward.1} parent=1 // pred_fallthru
      _
    %1052 = vsyncpa [#allocation3], 1

</llo_original>
